<compile_context>
chip_gen: v5e
topology: v5e:2x2
jax: 0.10.0
libtpu: 0.0.40
codegen_flags: <defaults>
</compile_context>

<pallas_src>
import functools

import jax
import jax.numpy as jnp
from jax.experimental import pallas as pl
from jax.experimental.pallas import tpu as pltpu


# ------------------------- module dimensions (fixed by the spec) -------------------
IN_FEATS = 16
OUT_FEATS = 8
H_FEATS = (32, 16, 32, 16, 32, 16)
NUM_CLASSES = 4


def _build_param_layout():
    """Row layout of the single packed parameter slab (width = 32 lanes)."""
    entries = [
        ("w1", IN_FEATS, H_FEATS[0]),
        ("w2", H_FEATS[0], H_FEATS[1]),
        ("w3a", OUT_FEATS, H_FEATS[2]),      # w3[:OUT_FEATS]  (folds the torch.cat)
        ("w3b", H_FEATS[1], H_FEATS[2]),     # w3[OUT_FEATS:]
        ("w4", H_FEATS[2], H_FEATS[3]),
        ("w5", H_FEATS[3], H_FEATS[4]),
        ("w6", H_FEATS[4], H_FEATS[5]),
        ("wc", H_FEATS[5], NUM_CLASSES),
        ("b1", 1, H_FEATS[0]),
        ("b2", 1, H_FEATS[1]),
        ("b3", 1, H_FEATS[2]),
        ("b4", 1, H_FEATS[3]),
        ("b5", 1, H_FEATS[4]),
        ("b6", 1, H_FEATS[5]),
        ("bc", 1, NUM_CLASSES),
    ]
    layout, row = {}, 0
    for name, nr, nc in entries:
        layout[name] = (row, nr, nc)
        row += nr
    rows = ((row + 7) // 8) * 8
    cols = max(nc for _, _, nc in entries)
    return layout, rows, cols


PARAM_LAYOUT, SLAB_ROWS, SLAB_COLS = _build_param_layout()


def pack_params(params):
    """Pack all weights/biases into ONE f32 slab.  Done once at init time."""
    vals = dict(params)
    vals["w3a"] = params["w3"][:OUT_FEATS]
    vals["w3b"] = params["w3"][OUT_FEATS:]
    slab = jnp.zeros((SLAB_ROWS, SLAB_COLS), jnp.float32)
    for name, (r0, nr, nc) in PARAM_LAYOUT.items():
        slab = slab.at[r0:r0 + nr, :nc].set(vals[name].reshape(nr, nc))
    return slab


# ----------------------------- fused Pallas kernel ---------------------------------

def _fused_kernel(a_in_ref, a_out_ref, x_in_ref, x_out_ref, p_ref, o_ref):
    """One graph sample per grid step.  Everything stays in VMEM/vregs."""

    def dot(a, b):
        return jnp.dot(a, b, preferred_element_type=jnp.float32)

    def relu(x):
        return jnp.maximum(x, 0.0)

    def param(name):
        r0, nr, nc = PARAM_LAYOUT[name]
        return p_ref[r0:r0 + nr, :nc]          # static slice of the packed slab

    BN, n = a_in_ref.shape                      # (B*n, n) = (64, 8)
    B = BN // n
    shift = n.bit_length() - 1                  # n is a power of two (8)

    # ---- block-diagonal inner adjacency, synthesized in VMEM (no HBM input) ----
    a_slab = a_in_ref[...]                                        # (64, 8)
    tiled = jnp.concatenate([a_slab] * B, axis=1)                 # (64, 64)
    r = jax.lax.broadcasted_iota(jnp.int32, (BN, BN), 0)
    c = jax.lax.broadcasted_iota(jnp.int32, (BN, BN), 1)
    same_graph = jnp.right_shift(r, shift) == jnp.right_shift(c, shift)
    a_bd = jnp.where(same_graph, tiled, 0.0)                      # (64, 64)

    # conv1 / conv2 over all B inner graphs as single 64-row MXU matmuls.
    h = relu(dot(dot(a_bd, x_in_ref[...]), param("w1")) + param("b1"))   # (64, 32)
    h = relu(dot(dot(a_bd, h), param("w2")) + param("b2"))               # (64, 16)

    # dgl.mean_nodes over each inner graph: pooling matmul against an
    # iota-synthesized (B, B*n) mean matrix (no HBM input, no wrapper glue).
    pr = jax.lax.broadcasted_iota(jnp.int32, (B, BN), 0)
    pc = jax.lax.broadcasted_iota(jnp.int32, (B, BN), 1)
    pool = jnp.where(pr == jnp.right_shift(pc, shift), 1.0 / n, 0.0)     # (8, 64)
    red = dot(pool, h)                                                    # (8, 16)

    # conv3 on [out_layer_feat | reduced]; W3 was split at init, so the
    # torch.cat is just the sum of two matmuls.
    a_out = a_out_ref[...]                                                # (8, 8)
    m3 = dot(x_out_ref[...], param("w3a")) + dot(red, param("w3b"))       # (8, 32)
    h = relu(dot(a_out, m3) + param("b3"))                                # (8, 32)
    h = relu(dot(dot(a_out, h), param("w4")) + param("b4"))               # (8, 16)
    h = relu(dot(dot(a_out, h), param("w5")) + param("b5"))               # (8, 32)
    h = relu(dot(dot(a_out, h), param("w6")) + param("b6"))               # (8, 16)

    # dgl.mean_nodes over the outer graph + classifier.
    hg = jnp.sum(h, axis=0, keepdims=True) * (1.0 / h.shape[0])           # (1, 16)
    o_ref[...] = (dot(hg, param("wc")) + param("bc")).astype(o_ref.dtype)  # (1, C)


# ------------------------------- JAX glue -------------------------------------------

def normalize_adj(adj_struct, edge_weight):
    """DGL GraphConv norm='both' (isolated nodes get zero norm, like DGL).
    NOTE: degrees are taken from the *structural* adjacency; verify against the
    original DGL EdgeWeightNorm semantics if weighted degrees are intended."""
    out_deg = jnp.sum(adj_struct, axis=0)   # per src
    in_deg = jnp.sum(adj_struct, axis=1)    # per dst
    inv_in = jnp.where(in_deg > 0, jax.lax.rsqrt(jnp.maximum(in_deg, 1e-30)), 0.0)
    inv_out = jnp.where(out_deg > 0, jax.lax.rsqrt(jnp.maximum(out_deg, 1e-30)), 0.0)
    return adj_struct * edge_weight * inv_in[:, None] * inv_out[None, :]


@jax.jit
def nested_gnn_forward(param_slab, a_in, a_out, in_layer_feat, out_layer_feat):
    """
    param_slab     : (176, 32)            packed weights+biases (pack_params, at init)
    a_in           : (S, B, n, n)         normalized inner adjacencies
    a_out          : (S, B, B)            normalized outer adjacencies
    in_layer_feat  : (S, B, n, in_feats)
    out_layer_feat : (S, B, out_feats)
    returns        : (S, num_classes)
    """
    S, B, n, _ = a_in.shape
    assert (n & (n - 1)) == 0, "inner-graph size must be a power of two"
    in_feats = in_layer_feat.shape[-1]
    out_feats = out_layer_feat.shape[-1]

    # Pure bitcast-level reshapes (no real wrapper compute).
    a_in_flat = a_in.reshape(S, B * n, n)
    x_in_flat = in_layer_feat.reshape(S, B * n, in_feats)

    out = pl.pallas_call(
        _fused_kernel,
        out_shape=jax.ShapeDtypeStruct((S, 1, NUM_CLASSES), jnp.float32),
        grid=(S,),
        in_specs=[
            pl.BlockSpec((None, B * n, n), lambda s: (s, 0, 0)),
            pl.BlockSpec((None, B, B), lambda s: (s, 0, 0)),
            pl.BlockSpec((None, B * n, in_feats), lambda s: (s, 0, 0)),
            pl.BlockSpec((None, B, out_feats), lambda s: (s, 0, 0)),
            pl.BlockSpec((SLAB_ROWS, SLAB_COLS), lambda s: (0, 0)),
        ],
        out_specs=pl.BlockSpec((None, 1, NUM_CLASSES), lambda s: (s, 0, 0)),
        compiler_params=pltpu.CompilerParams(dimension_semantics=("parallel",)),
    )(a_in_flat, a_out, x_in_flat, out_layer_feat, param_slab)
    return out.reshape(S, NUM_CLASSES)


def ref_forward(params, a_in, a_out, in_layer_feat, out_layer_feat):
    """Pure-JAX reference (single sample) for correctness checking."""
    def gconv(a, x, w, b):
        return jax.nn.relu(jnp.einsum("...ij,...jf->...if", a, x) @ w + b)
    h = gconv(a_in, in_layer_feat, params["w1"], params["b1"])
    h = gconv(a_in, h, params["w2"], params["b2"])
    red = jnp.mean(h, axis=1)
    merged = jnp.concatenate([out_layer_feat, red], -1)
    h = gconv(a_out, merged, params["w3"], params["b3"])
    h = gconv(a_out, h, params["w4"], params["b4"])
    h = gconv(a_out, h, params["w5"], params["b5"])
    h = gconv(a_out, h, params["w6"], params["b6"])
    hg = jnp.mean(h, axis=0, keepdims=True)
    return hg @ params["wc"] + params["bc"]


# ----------------------------------- main -------------------------------------------

if __name__ == "__main__":
    key = jax.random.PRNGKey(0)

    S = 8          # graph samples batched into one pallas_call (parallel grid axis)
    N_out = 8      # nodes in the outer graph == number of inner graphs
    n_in = 8       # nodes per inner graph

    # Deterministic parameters (xavier-ish uniform weights, zero biases).
    dims = [
        (IN_FEATS, H_FEATS[0]),
        (H_FEATS[0], H_FEATS[1]),
        (OUT_FEATS + H_FEATS[1], H_FEATS[2]),
        (H_FEATS[2], H_FEATS[3]),
        (H_FEATS[3], H_FEATS[4]),
        (H_FEATS[4], H_FEATS[5]),
    ]
    params = {}
    keys = jax.random.split(key, 16)
    for li, (fi, fo) in enumerate(dims, start=1):
        bound = (6.0 / (fi + fo)) ** 0.5
        params[f"w{li}"] = jax.random.uniform(keys[li], (fi, fo),
                                              minval=-bound, maxval=bound,
                                              dtype=jnp.float32)
        params[f"b{li}"] = jnp.zeros((1, fo), jnp.float32)
    bound = (6.0 / (H_FEATS[5] + NUM_CLASSES)) ** 0.5
    params["wc"] = jax.random.uniform(keys[7], (H_FEATS[5], NUM_CLASSES),
                                      minval=-bound, maxval=bound, dtype=jnp.float32)
    params["bc"] = jnp.zeros((1, NUM_CLASSES), jnp.float32)

    # Single packed parameter slab, built ONCE at init time.
    param_slab = pack_params(params)

    # Deterministic graphs + features for S samples.
    k_ain, k_aout, k_wi, k_wo, k_fin, k_fout = jax.random.split(keys[8], 6)
    inner_struct = (jax.random.uniform(k_ain, (S, N_out, n_in, n_in)) < 0.5
                    ).astype(jnp.float32)
    inner_ew = jax.random.uniform(k_wi, (S, N_out, n_in, n_in), minval=0.1, maxval=1.0)
    outer_struct = (jax.random.uniform(k_aout, (S, N_out, N_out)) < 0.5
                    ).astype(jnp.float32)
    outer_ew = jax.random.uniform(k_wo, (S, N_out, N_out), minval=0.1, maxval=1.0)

    a_in = jax.vmap(jax.vmap(normalize_adj))(inner_struct, inner_ew)   # (S, B, n, n)
    a_out = jax.vmap(normalize_adj)(outer_struct, outer_ew)            # (S, B, B)

    in_layer_feat = jax.random.normal(k_fin, (S, N_out, n_in, IN_FEATS), jnp.float32)
    out_layer_feat = jax.random.normal(k_fout, (S, N_out, OUT_FEATS), jnp.float32)

    out = nested_gnn_forward(param_slab, a_in, a_out, in_layer_feat, out_layer_feat)
    out = jax.block_until_ready(out)

    ref = jax.vmap(lambda ai, ao, xi, xo: ref_forward(params, ai, ao, xi, xo))(
        a_in, a_out, in_layer_feat, out_layer_feat).reshape(S, NUM_CLASSES)

    assert out.shape == (S, NUM_CLASSES)
    assert jnp.allclose(out, ref, atol=1e-4, rtol=1e-4), (out, ref)

    print("KERNEL_OK")
</pallas_src>

<mosaic_0001>
module attributes {stable_mosaic.version = 11 : i64} {
  func.func @_fused_kernel(%arg0: i32, %arg1: memref<1x64x8xf32, #tpu.memory_space<vmem>>, %arg2: memref<1x8x8xf32, #tpu.memory_space<vmem>>, %arg3: memref<1x64x16xf32, #tpu.memory_space<vmem>>, %arg4: memref<1x8x8xf32, #tpu.memory_space<vmem>>, %arg5: memref<176x32xf32, #tpu.memory_space<vmem>>, %arg6: memref<1x1x4xf32, #tpu.memory_space<vmem>>) attributes {dimension_semantics = [#tpu.dimension_semantics<parallel>], iteration_bounds = array<i64: 8>, scalar_prefetch = 0 : i64, scratch_operands = 0 : i64, tpu.core_type = #tpu.core_type<tc>, window_params = [{transform_indices = @transform_0, window_bounds = array<i64: 1, 64, 8>}, {transform_indices = @transform_1, window_bounds = array<i64: 1, 8, 8>}, {transform_indices = @transform_2, window_bounds = array<i64: 1, 64, 16>}, {transform_indices = @transform_3, window_bounds = array<i64: 1, 8, 8>}, {pipeline_mode = #tpu.pipeline_mode<synchronous>, transform_indices = @transform_4, window_bounds = array<i64: 176, 32>}, {transform_indices = @transform_5, window_bounds = array<i64: 1, 1, 4>}]} {
    %c0 = arith.constant 0 : index
    %c0_0 = arith.constant 0 : index
    %c0_1 = arith.constant 0 : index
    %0 = vector.load %arg1[%c0, %c0_0, %c0_1] : memref<1x64x8xf32, #tpu.memory_space<vmem>>, vector<1x64x8xf32>
    %1 = vector.shape_cast %0 : vector<1x64x8xf32> to vector<64x8xf32>
    %2 = tpu.concatenate %1, %1, %1, %1, %1, %1, %1, %1 in 1 : vector<64x8xf32>, vector<64x8xf32>, vector<64x8xf32>, vector<64x8xf32>, vector<64x8xf32>, vector<64x8xf32>, vector<64x8xf32>, vector<64x8xf32> -> vector<64x64xf32>
    %3 = tpu.iota {dimensions = array<i32: 0>} : vector<64x64xi32>
    %4 = tpu.iota {dimensions = array<i32: 1>} : vector<64x64xi32>
    %c3_i32 = arith.constant 3 : i32
    %5 = vector.broadcast %c3_i32 : i32 to vector<64x64xi32>
    %6 = arith.shrsi %3, %5 : vector<64x64xi32>
    %c3_i32_2 = arith.constant 3 : i32
    %7 = vector.broadcast %c3_i32_2 : i32 to vector<64x64xi32>
    %8 = arith.shrsi %4, %7 : vector<64x64xi32>
    %9 = arith.cmpi eq, %6, %8 : vector<64x64xi32>
    %cst = arith.constant 0.000000e+00 : f32
    %10 = vector.broadcast %cst : f32 to vector<64x64xf32>
    %11 = arith.select %9, %2, %10 : vector<64x64xi1>, vector<64x64xf32>
    %c0_3 = arith.constant 0 : index
    %c0_4 = arith.constant 0 : index
    %c0_5 = arith.constant 0 : index
    %12 = vector.load %arg3[%c0_3, %c0_4, %c0_5] : memref<1x64x16xf32, #tpu.memory_space<vmem>>, vector<1x64x16xf32>
    %13 = vector.shape_cast %12 : vector<1x64x16xf32> to vector<64x16xf32>
    %cst_6 = arith.constant dense<0.000000e+00> : vector<64x16xf32>
    %14 = tpu.matmul %11, %13, %cst_6 {dimension_numbers = #tpu.dot_dimension_numbers<[1], [0], [0], [1], [0, 0, 1, 1], [], []>} : vector<64x64xf32>, vector<64x16xf32>, vector<64x16xf32> -> vector<64x16xf32>
    %c0_7 = arith.constant 0 : index
    %c0_8 = arith.constant 0 : index
    %15 = vector.load %arg5[%c0_7, %c0_8] : memref<176x32xf32, #tpu.memory_space<vmem>>, vector<16x32xf32>
    %cst_9 = arith.constant dense<0.000000e+00> : vector<64x32xf32>
    %16 = tpu.matmul %14, %15, %cst_9 {dimension_numbers = #tpu.dot_dimension_numbers<[1], [0], [0], [1], [0, 0, 1, 1], [], []>} : vector<64x16xf32>, vector<16x32xf32>, vector<64x32xf32> -> vector<64x32xf32>
    %c168 = arith.constant 168 : index
    %c0_10 = arith.constant 0 : index
    %17 = vector.load %arg5[%c168, %c0_10] : memref<176x32xf32, #tpu.memory_space<vmem>>, vector<1x32xf32>
    %18 = vector.broadcast %17 : vector<1x32xf32> to vector<64x32xf32>
    %19 = arith.addf %16, %18 : vector<64x32xf32>
    %cst_11 = arith.constant 0.000000e+00 : f32
    %20 = vector.broadcast %cst_11 : f32 to vector<64x32xf32>
    %21 = arith.maximumf %19, %20 : vector<64x32xf32>
    %cst_12 = arith.constant dense<0.000000e+00> : vector<64x32xf32>
    %22 = tpu.matmul %11, %21, %cst_12 {dimension_numbers = #tpu.dot_dimension_numbers<[1], [0], [0], [1], [0, 0, 1, 1], [], []>} : vector<64x64xf32>, vector<64x32xf32>, vector<64x32xf32> -> vector<64x32xf32>
    %c16 = arith.constant 16 : index
    %c0_13 = arith.constant 0 : index
    %23 = vector.load %arg5[%c16, %c0_13] : memref<176x32xf32, #tpu.memory_space<vmem>>, vector<32x16xf32>
    %cst_14 = arith.constant dense<0.000000e+00> : vector<64x16xf32>
    %24 = tpu.matmul %22, %23, %cst_14 {dimension_numbers = #tpu.dot_dimension_numbers<[1], [0], [0], [1], [0, 0, 1, 1], [], []>} : vector<64x32xf32>, vector<32x16xf32>, vector<64x16xf32> -> vector<64x16xf32>
    %c169 = arith.constant 169 : index
    %c0_15 = arith.constant 0 : index
    %25 = vector.load %arg5[%c169, %c0_15] : memref<176x32xf32, #tpu.memory_space<vmem>>, vector<1x16xf32>
    %26 = vector.broadcast %25 : vector<1x16xf32> to vector<64x16xf32>
    %27 = arith.addf %24, %26 : vector<64x16xf32>
    %cst_16 = arith.constant 0.000000e+00 : f32
    %28 = vector.broadcast %cst_16 : f32 to vector<64x16xf32>
    %29 = arith.maximumf %27, %28 : vector<64x16xf32>
    %30 = tpu.iota {dimensions = array<i32: 0>} : vector<8x64xi32>
    %31 = tpu.iota {dimensions = array<i32: 1>} : vector<8x64xi32>
    %c3_i32_17 = arith.constant 3 : i32
    %32 = vector.broadcast %c3_i32_17 : i32 to vector<8x64xi32>
    %33 = arith.shrsi %31, %32 : vector<8x64xi32>
    %34 = arith.cmpi eq, %30, %33 : vector<8x64xi32>
    %cst_18 = arith.constant 1.250000e-01 : f32
    %cst_19 = arith.constant 0.000000e+00 : f32
    %35 = vector.broadcast %cst_18 : f32 to vector<8x64xf32>
    %36 = vector.broadcast %cst_19 : f32 to vector<8x64xf32>
    %37 = arith.select %34, %35, %36 : vector<8x64xi1>, vector<8x64xf32>
    %cst_20 = arith.constant dense<0.000000e+00> : vector<8x16xf32>
    %38 = tpu.matmul %37, %29, %cst_20 {dimension_numbers = #tpu.dot_dimension_numbers<[1], [0], [0], [1], [0, 0, 1, 1], [], []>} : vector<8x64xf32>, vector<64x16xf32>, vector<8x16xf32> -> vector<8x16xf32>
    %c0_21 = arith.constant 0 : index
    %c0_22 = arith.constant 0 : index
    %c0_23 = arith.constant 0 : index
    %39 = vector.load %arg2[%c0_21, %c0_22, %c0_23] : memref<1x8x8xf32, #tpu.memory_space<vmem>>, vector<1x8x8xf32>
    %40 = vector.shape_cast %39 : vector<1x8x8xf32> to vector<8x8xf32>
    %c0_24 = arith.constant 0 : index
    %c0_25 = arith.constant 0 : index
    %c0_26 = arith.constant 0 : index
    %41 = vector.load %arg4[%c0_24, %c0_25, %c0_26] : memref<1x8x8xf32, #tpu.memory_space<vmem>>, vector<1x8x8xf32>
    %42 = vector.shape_cast %41 : vector<1x8x8xf32> to vector<8x8xf32>
    %c48 = arith.constant 48 : index
    %c0_27 = arith.constant 0 : index
    %43 = vector.load %arg5[%c48, %c0_27] : memref<176x32xf32, #tpu.memory_space<vmem>>, vector<8x32xf32>
    %cst_28 = arith.constant dense<0.000000e+00> : vector<8x32xf32>
    %44 = tpu.matmul %42, %43, %cst_28 {dimension_numbers = #tpu.dot_dimension_numbers<[1], [0], [0], [1], [0, 0, 1, 1], [], []>} : vector<8x8xf32>, vector<8x32xf32>, vector<8x32xf32> -> vector<8x32xf32>
    %c56 = arith.constant 56 : index
    %c0_29 = arith.constant 0 : index
    %45 = vector.load %arg5[%c56, %c0_29] : memref<176x32xf32, #tpu.memory_space<vmem>>, vector<16x32xf32>
    %cst_30 = arith.constant dense<0.000000e+00> : vector<8x32xf32>
    %46 = tpu.matmul %38, %45, %cst_30 {dimension_numbers = #tpu.dot_dimension_numbers<[1], [0], [0], [1], [0, 0, 1, 1], [], []>} : vector<8x16xf32>, vector<16x32xf32>, vector<8x32xf32> -> vector<8x32xf32>
    %47 = arith.addf %44, %46 : vector<8x32xf32>
    %cst_31 = arith.constant dense<0.000000e+00> : vector<8x32xf32>
    %48 = tpu.matmul %40, %47, %cst_31 {dimension_numbers = #tpu.dot_dimension_numbers<[1], [0], [0], [1], [0, 0, 1, 1], [], []>} : vector<8x8xf32>, vector<8x32xf32>, vector<8x32xf32> -> vector<8x32xf32>
    %c170 = arith.constant 170 : index
    %c0_32 = arith.constant 0 : index
    %49 = vector.load %arg5[%c170, %c0_32] : memref<176x32xf32, #tpu.memory_space<vmem>>, vector<1x32xf32>
    %50 = vector.broadcast %49 : vector<1x32xf32> to vector<8x32xf32>
    %51 = arith.addf %48, %50 : vector<8x32xf32>
    %cst_33 = arith.constant 0.000000e+00 : f32
    %52 = vector.broadcast %cst_33 : f32 to vector<8x32xf32>
    %53 = arith.maximumf %51, %52 : vector<8x32xf32>
    %cst_34 = arith.constant dense<0.000000e+00> : vector<8x32xf32>
    %54 = tpu.matmul %40, %53, %cst_34 {dimension_numbers = #tpu.dot_dimension_numbers<[1], [0], [0], [1], [0, 0, 1, 1], [], []>} : vector<8x8xf32>, vector<8x32xf32>, vector<8x32xf32> -> vector<8x32xf32>
    %c72 = arith.constant 72 : index
    %c0_35 = arith.constant 0 : index
    %55 = vector.load %arg5[%c72, %c0_35] : memref<176x32xf32, #tpu.memory_space<vmem>>, vector<32x16xf32>
    %cst_36 = arith.constant dense<0.000000e+00> : vector<8x16xf32>
    %56 = tpu.matmul %54, %55, %cst_36 {dimension_numbers = #tpu.dot_dimension_numbers<[1], [0], [0], [1], [0, 0, 1, 1], [], []>} : vector<8x32xf32>, vector<32x16xf32>, vector<8x16xf32> -> vector<8x16xf32>
    %c171 = arith.constant 171 : index
    %c0_37 = arith.constant 0 : index
    %57 = vector.load %arg5[%c171, %c0_37] : memref<176x32xf32, #tpu.memory_space<vmem>>, vector<1x16xf32>
    %58 = vector.broadcast %57 : vector<1x16xf32> to vector<8x16xf32>
    %59 = arith.addf %56, %58 : vector<8x16xf32>
    %cst_38 = arith.constant 0.000000e+00 : f32
    %60 = vector.broadcast %cst_38 : f32 to vector<8x16xf32>
    %61 = arith.maximumf %59, %60 : vector<8x16xf32>
    %cst_39 = arith.constant dense<0.000000e+00> : vector<8x16xf32>
    %62 = tpu.matmul %40, %61, %cst_39 {dimension_numbers = #tpu.dot_dimension_numbers<[1], [0], [0], [1], [0, 0, 1, 1], [], []>} : vector<8x8xf32>, vector<8x16xf32>, vector<8x16xf32> -> vector<8x16xf32>
    %c104 = arith.constant 104 : index
    %c0_40 = arith.constant 0 : index
    %63 = vector.load %arg5[%c104, %c0_40] : memref<176x32xf32, #tpu.memory_space<vmem>>, vector<16x32xf32>
    %cst_41 = arith.constant dense<0.000000e+00> : vector<8x32xf32>
    %64 = tpu.matmul %62, %63, %cst_41 {dimension_numbers = #tpu.dot_dimension_numbers<[1], [0], [0], [1], [0, 0, 1, 1], [], []>} : vector<8x16xf32>, vector<16x32xf32>, vector<8x32xf32> -> vector<8x32xf32>
    %c172 = arith.constant 172 : index
    %c0_42 = arith.constant 0 : index
    %65 = vector.load %arg5[%c172, %c0_42] : memref<176x32xf32, #tpu.memory_space<vmem>>, vector<1x32xf32>
    %66 = vector.broadcast %65 : vector<1x32xf32> to vector<8x32xf32>
    %67 = arith.addf %64, %66 : vector<8x32xf32>
    %cst_43 = arith.constant 0.000000e+00 : f32
    %68 = vector.broadcast %cst_43 : f32 to vector<8x32xf32>
    %69 = arith.maximumf %67, %68 : vector<8x32xf32>
    %cst_44 = arith.constant dense<0.000000e+00> : vector<8x32xf32>
    %70 = tpu.matmul %40, %69, %cst_44 {dimension_numbers = #tpu.dot_dimension_numbers<[1], [0], [0], [1], [0, 0, 1, 1], [], []>} : vector<8x8xf32>, vector<8x32xf32>, vector<8x32xf32> -> vector<8x32xf32>
    %c120 = arith.constant 120 : index
    %c0_45 = arith.constant 0 : index
    %71 = vector.load %arg5[%c120, %c0_45] : memref<176x32xf32, #tpu.memory_space<vmem>>, vector<32x16xf32>
    %cst_46 = arith.constant dense<0.000000e+00> : vector<8x16xf32>
    %72 = tpu.matmul %70, %71, %cst_46 {dimension_numbers = #tpu.dot_dimension_numbers<[1], [0], [0], [1], [0, 0, 1, 1], [], []>} : vector<8x32xf32>, vector<32x16xf32>, vector<8x16xf32> -> vector<8x16xf32>
    %c173 = arith.constant 173 : index
    %c0_47 = arith.constant 0 : index
    %73 = vector.load %arg5[%c173, %c0_47] : memref<176x32xf32, #tpu.memory_space<vmem>>, vector<1x16xf32>
    %74 = vector.broadcast %73 : vector<1x16xf32> to vector<8x16xf32>
    %75 = arith.addf %72, %74 : vector<8x16xf32>
    %cst_48 = arith.constant 0.000000e+00 : f32
    %76 = vector.broadcast %cst_48 : f32 to vector<8x16xf32>
    %77 = arith.maximumf %75, %76 : vector<8x16xf32>
    %cst_49 = arith.constant dense<0.000000e+00> : vector<16xf32>
    %78 = vector.multi_reduction <add>, %77, %cst_49 [0] : vector<8x16xf32> to vector<16xf32>
    %79 = vector.shape_cast %78 : vector<16xf32> to vector<1x16xf32>
    %cst_50 = arith.constant 1.250000e-01 : f32
    %80 = vector.broadcast %cst_50 : f32 to vector<1x16xf32>
    %81 = arith.mulf %79, %80 : vector<1x16xf32>
    %c152 = arith.constant 152 : index
    %c0_51 = arith.constant 0 : index
    %82 = vector.load %arg5[%c152, %c0_51] : memref<176x32xf32, #tpu.memory_space<vmem>>, vector<16x4xf32>
    %cst_52 = arith.constant dense<0.000000e+00> : vector<1x4xf32>
    %83 = tpu.matmul %81, %82, %cst_52 {dimension_numbers = #tpu.dot_dimension_numbers<[1], [0], [0], [1], [0, 0, 1, 1], [], []>} : vector<1x16xf32>, vector<16x4xf32>, vector<1x4xf32> -> vector<1x4xf32>
    %c174 = arith.constant 174 : index
    %c0_53 = arith.constant 0 : index
    %84 = vector.load %arg5[%c174, %c0_53] : memref<176x32xf32, #tpu.memory_space<vmem>>, vector<1x4xf32>
    %85 = arith.addf %83, %84 : vector<1x4xf32>
    %c0_54 = arith.constant 0 : index
    %c0_55 = arith.constant 0 : index
    %c0_56 = arith.constant 0 : index
    %86 = vector.load %arg6[%c0_54, %c0_55, %c0_56] : memref<1x1x4xf32, #tpu.memory_space<vmem>>, vector<1x1x4xf32>
    %87 = vector.shape_cast %86 : vector<1x1x4xf32> to vector<1x4xf32>
    %88 = vector.shape_cast %85 : vector<1x4xf32> to vector<1x1x4xf32>
    tpu.vector_store %arg6[%c0_54, %c0_55, %c0_56], %88 {strides = array<i32>} : memref<1x1x4xf32, #tpu.memory_space<vmem>>, vector<1x1x4xf32>,
    return
  }
  func.func @transform_0(%arg0: i32) -> (i32, i32, i32) {
    %c0_i32 = arith.constant 0 : i32
    %c0_i32_0 = arith.constant 0 : i32
    %c0_i32_1 = arith.constant 0 : i32
    return %arg0, %c0_i32, %c0_i32_0 : i32, i32, i32
  }
  func.func @transform_1(%arg0: i32) -> (i32, i32, i32) {
    %c0_i32 = arith.constant 0 : i32
    %c0_i32_0 = arith.constant 0 : i32
    %c0_i32_1 = arith.constant 0 : i32
    return %arg0, %c0_i32, %c0_i32_0 : i32, i32, i32
  }
  func.func @transform_2(%arg0: i32) -> (i32, i32, i32) {
    %c0_i32 = arith.constant 0 : i32
    %c0_i32_0 = arith.constant 0 : i32
    %c0_i32_1 = arith.constant 0 : i32
    return %arg0, %c0_i32, %c0_i32_0 : i32, i32, i32
  }
  func.func @transform_3(%arg0: i32) -> (i32, i32, i32) {
    %c0_i32 = arith.constant 0 : i32
    %c0_i32_0 = arith.constant 0 : i32
    %c0_i32_1 = arith.constant 0 : i32
    return %arg0, %c0_i32, %c0_i32_0 : i32, i32, i32
  }
  func.func @transform_4(%arg0: i32) -> (i32, i32) {
    %c0_i32 = arith.constant 0 : i32
    %c0_i32_0 = arith.constant 0 : i32
    %c0_i32_1 = arith.constant 0 : i32
    return %c0_i32, %c0_i32_0 : i32, i32
  }
  func.func @transform_5(%arg0: i32) -> (i32, i32, i32) {
    %c0_i32 = arith.constant 0 : i32
    %c0_i32_0 = arith.constant 0 : i32
    %c0_i32_1 = arith.constant 0 : i32
    return %arg0, %c0_i32, %c0_i32_0 : i32, i32, i32
  }
}

</mosaic_0001>

<llo_original>
// kernel: nested_gnn_forward.1
$region0: #{nested_gnn_forward.1}
  #allocation0 [shape = 'u32[]', space=smem, size = 0x4, offset = 0x4, fixed_abs, tag = 'smem constant byte address 0x4 - core index']
  #allocation1 [shape = 'u32[72,128]{1,0:T(1,128)}', space=vmem, size = 0x9000, scoped, tag = 'internal scratch']
  %s0 = inlined_call_operand.hbm [shape: f32[8,64,8], index: 0, kind: input, shape index: {}]
  %s1 = inlined_call_operand.vmem [shape: f32[8,8,8], index: 1, kind: input, shape index: {}]
  %s2 = inlined_call_operand.hbm [shape: f32[8,64,16], index: 2, kind: input, shape index: {}]
  %s3 = inlined_call_operand.vmem [shape: f32[8,8,8], index: 3, kind: input, shape index: {}]
  %s4 = inlined_call_operand.vmem [shape: f32[176,32], index: 4, kind: input, shape index: {}]
  %s5 = inlined_call_operand.vmem [shape: f32[8,1,4], index: 5, kind: output, shape index: {}]
  %s6 = sld [smem:[#allocation0]]
  $region61: #{nested_gnn_forward.1} parent=0
    _
  %s8 = ssub.s32 1, %s6
  %s9 = scalar_select 0, %s8, %s6
  $region1: #{nested_gnn_forward.1} parent=0
    #allocation2 [shape = 'u8[65536]{0}', space=vmem, size = 0x10000, scoped, tag = 'input window, operand 0']
    #allocation3 [shape = 's32[2]{0}', space=sflag, size = 0x8, scoped, tag = 'scoped memory for nested_gnn_forward.1']
    #allocation4 [shape = 'u8[65536]{0}', space=vmem, size = 0x10000, scoped, tag = 'input window, operand 2']
    #allocation5 [shape = 's32[2]{0}', space=sflag, size = 0x8, scoped, tag = 'scoped memory for nested_gnn_forward.1']
    %10 = vsyncpa [#allocation3], 0
    %s11 = scalar_lea.sflag [#allocation3], 1
    %12 = vsyncpa %s11, 0
    %13 = vsyncpa [#allocation5], 0
    %s14 = scalar_lea.sflag [#allocation5], 1
    %15 = vsyncpa %s14, 0
    loop: start=0, step=1, limit=10
    $region2: #{nested_gnn_forward.1} parent=1 // loop_pre_header
      _
    $region3: #{nested_gnn_forward.1} parent=1 // loop_header
      %s17 = sphi 0, %s21
      %p18 = scmp.ge.s32.totalorder %s17, 10
      %s27 = sphi 0, %s29
      %s30 = sphi 0, %s27
      %s31 = sphi 0, %s30
      %s47 = sphi 0, %s31
      %s53 = sphi 0, %s55
      %s56 = sphi 0, %s53
      %s57 = sphi 0, %s56
      %s73 = sphi 0, %s57
      %s79 = sphi 0, %s81
      %s82 = sphi 0, %s79
      %s83 = sphi 0, %s82
      %s99 = sphi 0, %s83
      %s105 = sphi 0, %s107
      %s108 = sphi 0, %s105
      %s109 = sphi 0, %s108
      %s125 = sphi 0, %s109
      %s129 = sphi 0, %s129
      %s131 = sphi 0, %s129
      %s132 = sphi 0, %s131
      %s146 = sphi 0, %s132
      %s152 = sphi 0, %s154
      %s155 = sphi 0, %s152
      %s156 = sphi 0, %s155
      %s172 = sphi 0, %s156
    $region4: #{nested_gnn_forward.1} parent=1 // loop_header_branch
      %20 = sbr.rel (%p18) target = $region8
    $region5: #{nested_gnn_forward.1} parent=1 // loop_body
      %s22 = ssub.s32 %s17, 1
      %s23 = ssub.s32 %s17, 2
      %s24 = sadd.s32 %s17, 1
      %s25 = ssub.s32 %s17, %s24
      %p26 = scmp.eq.s32.totalorder %s25, 0
      %s28 = sadd.s32 %s27, 1
      %s29 = scalar_select %p26, %s27, %s28
      %p32 = pneg %p26
      %p33 = scmp.eq.s32.totalorder %s17, 7
      %p34 = por %p32, %p33
      %p35 = scmp.ne.s32.totalorder %s27, %s30
      %p36 = scmp.eq.s32.totalorder %s17, 0
      %p37 = por %p35, %p36
      %p38 = scmp.ne.s32.totalorder %s27, %s30
      %p39 = scmp.eq.s32.totalorder %s22, 7
      %p40 = por %p38, %p39
      %p41 = scmp.ne.s32.totalorder %s30, %s31
      %p42 = scmp.eq.s32.totalorder %s22, 0
      %p43 = por %p41, %p42
      %p44 = scmp.ne.s32.totalorder %s30, %s31
      %p45 = scmp.eq.s32.totalorder %s23, 7
      %p46 = por %p44, %p45
      %p48 = scmp.ne.s32.totalorder %s31, %s47
      %p49 = scmp.eq.s32.totalorder %s23, 0
      %p50 = por %p48, %p49
      %s51 = ssub.s32 %s17, %s24
      %p52 = scmp.eq.s32.totalorder %s51, 0
      %s54 = sadd.s32 %s53, 1
      %s55 = scalar_select %p52, %s53, %s54
      %p58 = pneg %p52
      %p59 = scmp.eq.s32.totalorder %s17, 7
      %p60 = por %p58, %p59
      %p61 = scmp.ne.s32.totalorder %s53, %s56
      %p62 = scmp.eq.s32.totalorder %s17, 0
      %p63 = por %p61, %p62
      %p64 = scmp.ne.s32.totalorder %s53, %s56
      %p65 = scmp.eq.s32.totalorder %s22, 7
      %p66 = por %p64, %p65
      %p67 = scmp.ne.s32.totalorder %s56, %s57
      %p68 = scmp.eq.s32.totalorder %s22, 0
      %p69 = por %p67, %p68
      %p70 = scmp.ne.s32.totalorder %s56, %s57
      %p71 = scmp.eq.s32.totalorder %s23, 7
      %p72 = por %p70, %p71
      %p74 = scmp.ne.s32.totalorder %s57, %s73
      %p75 = scmp.eq.s32.totalorder %s23, 0
      %p76 = por %p74, %p75
      %s77 = ssub.s32 %s17, %s24
      %p78 = scmp.eq.s32.totalorder %s77, 0
      %s80 = sadd.s32 %s79, 1
      %s81 = scalar_select %p78, %s79, %s80
      %p84 = pneg %p78
      %p85 = scmp.eq.s32.totalorder %s17, 7
      %p86 = por %p84, %p85
      %p87 = scmp.ne.s32.totalorder %s79, %s82
      %p88 = scmp.eq.s32.totalorder %s17, 0
      %p89 = por %p87, %p88
      %p90 = scmp.ne.s32.totalorder %s79, %s82
      %p91 = scmp.eq.s32.totalorder %s22, 7
      %p92 = por %p90, %p91
      %p93 = scmp.ne.s32.totalorder %s82, %s83
      %p94 = scmp.eq.s32.totalorder %s22, 0
      %p95 = por %p93, %p94
      %p96 = scmp.ne.s32.totalorder %s82, %s83
      %p97 = scmp.eq.s32.totalorder %s23, 7
      %p98 = por %p96, %p97
      %p100 = scmp.ne.s32.totalorder %s83, %s99
      %p101 = scmp.eq.s32.totalorder %s23, 0
      %p102 = por %p100, %p101
      %s103 = ssub.s32 %s17, %s24
      %p104 = scmp.eq.s32.totalorder %s103, 0
      %s106 = sadd.s32 %s105, 1
      %s107 = scalar_select %p104, %s105, %s106
      %p110 = pneg %p104
      %p111 = scmp.eq.s32.totalorder %s17, 7
      %p112 = por %p110, %p111
      %p113 = scmp.ne.s32.totalorder %s105, %s108
      %p114 = scmp.eq.s32.totalorder %s17, 0
      %p115 = por %p113, %p114
      %p116 = scmp.ne.s32.totalorder %s105, %s108
      %p117 = scmp.eq.s32.totalorder %s22, 7
      %p118 = por %p116, %p117
      %p119 = scmp.ne.s32.totalorder %s108, %s109
      %p120 = scmp.eq.s32.totalorder %s22, 0
      %p121 = por %p119, %p120
      %p122 = scmp.ne.s32.totalorder %s108, %s109
      %p123 = scmp.eq.s32.totalorder %s23, 7
      %p124 = por %p122, %p123
      %p126 = scmp.ne.s32.totalorder %s109, %s125
      %p127 = scmp.eq.s32.totalorder %s23, 0
      %p128 = por %p126, %p127
      %s130 = sadd.s32 %s129, 1
      %p133 = scmp.eq.s32.totalorder %s17, 7
      %p134 = scmp.ne.s32.totalorder %s129, %s131
      %p135 = scmp.eq.s32.totalorder %s17, 0
      %p136 = por %p134, %p135
      %p137 = scmp.ne.s32.totalorder %s129, %s131
      %p138 = scmp.eq.s32.totalorder %s22, 7
      %p139 = por %p137, %p138
      %p140 = scmp.ne.s32.totalorder %s131, %s132
      %p141 = scmp.eq.s32.totalorder %s22, 0
      %p142 = por %p140, %p141
      %p143 = scmp.ne.s32.totalorder %s131, %s132
      %p144 = scmp.eq.s32.totalorder %s23, 7
      %p145 = por %p143, %p144
      %p147 = scmp.ne.s32.totalorder %s132, %s146
      %p148 = scmp.eq.s32.totalorder %s23, 0
      %p149 = por %p147, %p148
      %s150 = ssub.s32 %s17, %s24
      %p151 = scmp.eq.s32.totalorder %s150, 0
      %s153 = sadd.s32 %s152, 1
      %s154 = scalar_select %p151, %s152, %s153
      %p157 = pneg %p151
      %p158 = scmp.eq.s32.totalorder %s17, 7
      %p159 = por %p157, %p158
      %p160 = scmp.ne.s32.totalorder %s152, %s155
      %p161 = scmp.eq.s32.totalorder %s17, 0
      %p162 = por %p160, %p161
      %p163 = scmp.ne.s32.totalorder %s152, %s155
      %p164 = scmp.eq.s32.totalorder %s22, 7
      %p165 = por %p163, %p164
      %p166 = scmp.ne.s32.totalorder %s155, %s156
      %p167 = scmp.eq.s32.totalorder %s22, 0
      %p168 = por %p166, %p167
      %p169 = scmp.ne.s32.totalorder %s155, %s156
      %p170 = scmp.eq.s32.totalorder %s23, 7
      %p171 = por %p169, %p170
      %p173 = scmp.ne.s32.totalorder %s156, %s172
      %p174 = scmp.eq.s32.totalorder %s23, 0
      %p175 = por %p173, %p174
      %p176 = scmp.le.s32.totalorder 1, %s17
      %p177 = scmp.lt.s32.totalorder %s17, 9
      %p178 = pnand %p176, %p177
      %p179 = pneg %p178
      // Predicated region
      $region9: #{nested_gnn_forward.1} parent=5 // pred_check
        _
      $region10: #{nested_gnn_forward.1} parent=5 // pred_check_branch
        %181 = sbr.rel (%p178) target = $region12
      $region11: #{nested_gnn_forward.1} parent=5 // pred_region
        %s182 = ssub.s32 %s17, 1
        // Predicated region
        $region13: #{nested_gnn_forward.1} parent=11 // pred_check
          %p183 = pneg %p142
        $region14: #{nested_gnn_forward.1} parent=11 // pred_check_branch
          %185 = sbr.rel (%p183) target = $region16
        $region15: #{nested_gnn_forward.1} parent=11 // pred_region
          _
        $region16: #{nested_gnn_forward.1} parent=11 // pred_fallthru
          _
      $region12: #{nested_gnn_forward.1} parent=5 // pred_fallthru
        _
      %p186 = scmp.lt.s32.totalorder %s17, 8
      // Predicated region
      $region17: #{nested_gnn_forward.1} parent=5 // pred_check
        %p187 = pneg %p186
      $region18: #{nested_gnn_forward.1} parent=5 // pred_check_branch
        %189 = sbr.rel (%p187) target = $region20
      $region19: #{nested_gnn_forward.1} parent=5 // pred_region
        // Predicated region
        $region21: #{nested_gnn_forward.1} parent=19 // pred_check
          %p190 = pneg %p37
        $region22: #{nested_gnn_forward.1} parent=19 // pred_check_branch
          %192 = sbr.rel (%p190) target = $region24
        $region23: #{nested_gnn_forward.1} parent=19 // pred_region
          %s193 = sand.u32 %s27, 1
          %s194 = scalar_lea.sflag [#allocation3], %s193
          %s195 = sand.u32 %s27, 1
          %s196 = smul.addr %s195, 64
          %s197 = scalar_lea.vmem [#allocation2], %s196
          %199 = vsyncadd %s194, 0
          %s200 = smul.addr %s17, 8
          %s201 = smul.addr %s200, 8
          %s202 = scalar_lea.hbm %s0, %s201
          %s203 = sshll.u32 %s202, 4
          %s204 = int_to_ptr.hbm [resolvable:$true] %s203
          %s205 = sshll.u32 %s197, 4
          %s206 = int_to_ptr.vmem [resolvable:$true] %s205
          %211 = dma.hbm_to_vmem [thread:$0]  %s204, 1024, %s206, %s194, 128, 128, 8
        $region24: #{nested_gnn_forward.1} parent=19 // pred_fallthru
          _
        // Predicated region
        $region25: #{nested_gnn_forward.1} parent=19 // pred_check
          %p212 = pneg %p63
        $region26: #{nested_gnn_forward.1} parent=19 // pred_check_branch
          %214 = sbr.rel (%p212) target = $region28
        $region27: #{nested_gnn_forward.1} parent=19 // pred_region
          %p215 = scmp.lt.s32.totalorder %s17, 7
          %s216 = scalar_select %p215, %s17, 7
          %s217 = smul.addr %s216, 8
          %s218 = scalar_lea.vmem %s1, %s217
        $region28: #{nested_gnn_forward.1} parent=19 // pred_fallthru
          _
        // Predicated region
        $region29: #{nested_gnn_forward.1} parent=19 // pred_check
          %p219 = pneg %p89
        $region30: #{nested_gnn_forward.1} parent=19 // pred_check_branch
          %221 = sbr.rel (%p219) target = $region32
        $region31: #{nested_gnn_forward.1} parent=19 // pred_region
          %s222 = sand.u32 %s79, 1
          %s223 = scalar_lea.sflag [#allocation5], %s222
          %s224 = sand.u32 %s79, 1
          %s225 = smul.addr %s224, 64
          %s226 = scalar_lea.vmem [#allocation4], %s225
          %228 = vsyncadd %s223, 0
          %s229 = smul.addr %s17, 8
          %s230 = smul.addr %s229, 8
          %s231 = scalar_lea.hbm %s2, %s230
          %s232 = sshll.u32 %s231, 4
          %s233 = int_to_ptr.hbm [resolvable:$true] %s232
          %s234 = sshll.u32 %s226, 4
          %s235 = int_to_ptr.vmem [resolvable:$true] %s234
          %240 = dma.hbm_to_vmem [thread:$0]  %s233, 1024, %s235, %s223, 128, 128, 8
        $region32: #{nested_gnn_forward.1} parent=19 // pred_fallthru
          _
        // Predicated region
        $region33: #{nested_gnn_forward.1} parent=19 // pred_check
          %p241 = pneg %p115
        $region34: #{nested_gnn_forward.1} parent=19 // pred_check_branch
          %243 = sbr.rel (%p241) target = $region36
        $region35: #{nested_gnn_forward.1} parent=19 // pred_region
          %p244 = scmp.lt.s32.totalorder %s17, 7
          %s245 = scalar_select %p244, %s17, 7
          %s246 = smul.addr %s245, 8
          %s247 = scalar_lea.vmem %s3, %s246
        $region36: #{nested_gnn_forward.1} parent=19 // pred_fallthru
          _
      $region20: #{nested_gnn_forward.1} parent=5 // pred_fallthru
        _
      %p248 = scmp.le.s32.totalorder 1, %s17
      %p249 = scmp.lt.s32.totalorder %s17, 9
      %p250 = pnand %p248, %p249
      %p251 = pneg %p250
      // Predicated region
      $region37: #{nested_gnn_forward.1} parent=5 // pred_check
        _
      $region38: #{nested_gnn_forward.1} parent=5 // pred_check_branch
        %253 = sbr.rel (%p250) target = $region40
      $region39: #{nested_gnn_forward.1} parent=5 // pred_region
        %s254 = ssub.s32 %s17, 1
        %s255 = sand.u32 %s30, 1
        %s256 = scalar_lea.sflag [#allocation3], %s255
        %s257 = sand.u32 %s30, 1
        %s258 = smul.addr %s257, 64
        %s259 = scalar_lea.vmem [#allocation2], %s258
        // Predicated region
        $region41: #{nested_gnn_forward.1} parent=39 // pred_check
          %p260 = pneg %p43
        $region42: #{nested_gnn_forward.1} parent=39 // pred_check_branch
          %262 = sbr.rel (%p260) target = $region44
        $region43: #{nested_gnn_forward.1} parent=39 // pred_region
          %264 = dma.done %s256, 1024
        $region44: #{nested_gnn_forward.1} parent=39 // pred_fallthru
          _
        %s265 = sand.u32 %s82, 1
        %s266 = scalar_lea.sflag [#allocation5], %s265
        %s267 = sand.u32 %s82, 1
        %s268 = smul.addr %s267, 64
        %s269 = scalar_lea.vmem [#allocation4], %s268
        // Predicated region
        $region45: #{nested_gnn_forward.1} parent=39 // pred_check
          %p270 = pneg %p95
        $region46: #{nested_gnn_forward.1} parent=39 // pred_check_branch
          %272 = sbr.rel (%p270) target = $region48
        $region47: #{nested_gnn_forward.1} parent=39 // pred_region
          %274 = dma.done %s266, 1024
        $region48: #{nested_gnn_forward.1} parent=39 // pred_fallthru
          _
        %s275 = sand.u32 %s30, 1
        %s276 = scalar_lea.sflag [#allocation3], %s275
        %s277 = sand.u32 %s30, 1
        %s278 = smul.addr %s277, 64
        %s279 = scalar_lea.vmem [#allocation2], %s278
        %p280 = pneg %p43
        %p281 = pneg %p40
        %p282 = scmp.lt.s32.totalorder %s22, 7
        %s283 = scalar_select %p282, %s22, 7
        %s284 = smul.addr %s283, 8
        %s285 = scalar_lea.vmem %s1, %s284
        %p286 = pneg %p69
        %p287 = pneg %p66
        %s288 = sand.u32 %s82, 1
        %s289 = scalar_lea.sflag [#allocation5], %s288
        %s290 = sand.u32 %s82, 1
        %s291 = smul.addr %s290, 64
        %s292 = scalar_lea.vmem [#allocation4], %s291
        %p293 = pneg %p95
        %p294 = pneg %p92
        %p295 = scmp.lt.s32.totalorder %s22, 7
        %s296 = scalar_select %p295, %s22, 7
        %s297 = smul.addr %s296, 8
        %s298 = scalar_lea.vmem %s3, %s297
        %p299 = pneg %p121
        %p300 = pneg %p118
        %p301 = pneg %p142
        %p302 = pneg %p139
        %p303 = pneg %p168
        %p304 = pneg %p165
        %p305 = scmp.lt.s32.totalorder %s22, 7
        %s306 = scalar_select %p305, %s22, 7
        %s307 = scalar_lea.vmem %s5, %s306
        %p308 = scmp.lt.s32.totalorder %s22, 7
        %s309 = scalar_select %p308, %s22, 7
        %s310 = smul.addr %s309, 8
        %s311 = scalar_lea.vmem %s1, %s310
        %p312 = scmp.lt.s32.totalorder %s22, 7
        %s313 = scalar_select %p312, %s22, 7
        %s314 = smul.addr %s313, 8
        %s315 = scalar_lea.vmem %s3, %s314
        %p316 = scmp.lt.s32.totalorder %s22, 7
        %s317 = scalar_select %p316, %s22, 7
        %s318 = scalar_lea.vmem %s5, %s317
        %v319 = vld [vmem:[%s259] sm:$0xff]
        %v320 = vld [vmem:[%s259 + $0x8] sm:$0xff]
        %v321 = vld [vmem:[%s259 + $0x10] sm:$0xff]
        %v322 = vld [vmem:[%s259 + $0x18] sm:$0xff]
        %v323 = vld [vmem:[%s259 + $0x20] sm:$0xff]
        %v324 = vld [vmem:[%s259 + $0x28] sm:$0xff]
        %v325 = vld [vmem:[%s259 + $0x30] sm:$0xff]
        %v326 = vld [vmem:[%s259 + $0x38] sm:$0xff]
        %335 = vrot.lane.b32.xlu0 %v319, 8
        %v336 = vpop.permute.xlu0 %335
        %337 = vrot.lane.b32.xlu0 %v320, 8
        %v338 = vpop.permute.xlu0 %337
        %339 = vrot.lane.b32.xlu0 %v321, 8
        %v340 = vpop.permute.xlu0 %339
        %341 = vrot.lane.b32.xlu0 %v322, 8
        %v342 = vpop.permute.xlu0 %341
        %343 = vrot.lane.b32.xlu0 %v323, 8
        %v344 = vpop.permute.xlu0 %343
        %345 = vrot.lane.b32.xlu0 %v324, 8
        %v346 = vpop.permute.xlu0 %345
        %347 = vrot.lane.b32.xlu0 %v325, 8
        %v348 = vpop.permute.xlu0 %347
        %349 = vrot.lane.b32.xlu0 %v326, 8
        %v350 = vpop.permute.xlu0 %349
        %359 = vrot.lane.b32.xlu0 %v319, 16
        %v360 = vpop.permute.xlu0 %359
        %361 = vrot.lane.b32.xlu0 %v320, 16
        %v362 = vpop.permute.xlu0 %361
        %363 = vrot.lane.b32.xlu0 %v321, 16
        %v364 = vpop.permute.xlu0 %363
        %365 = vrot.lane.b32.xlu0 %v322, 16
        %v366 = vpop.permute.xlu0 %365
        %367 = vrot.lane.b32.xlu0 %v323, 16
        %v368 = vpop.permute.xlu0 %367
        %369 = vrot.lane.b32.xlu0 %v324, 16
        %v370 = vpop.permute.xlu0 %369
        %371 = vrot.lane.b32.xlu0 %v325, 16
        %v372 = vpop.permute.xlu0 %371
        %373 = vrot.lane.b32.xlu0 %v326, 16
        %v374 = vpop.permute.xlu0 %373
        %383 = vrot.lane.b32.xlu0 %v319, 24
        %v384 = vpop.permute.xlu0 %383
        %385 = vrot.lane.b32.xlu0 %v320, 24
        %v386 = vpop.permute.xlu0 %385
        %387 = vrot.lane.b32.xlu0 %v321, 24
        %v388 = vpop.permute.xlu0 %387
        %389 = vrot.lane.b32.xlu0 %v322, 24
        %v390 = vpop.permute.xlu0 %389
        %391 = vrot.lane.b32.xlu0 %v323, 24
        %v392 = vpop.permute.xlu0 %391
        %393 = vrot.lane.b32.xlu0 %v324, 24
        %v394 = vpop.permute.xlu0 %393
        %395 = vrot.lane.b32.xlu0 %v325, 24
        %v396 = vpop.permute.xlu0 %395
        %397 = vrot.lane.b32.xlu0 %v326, 24
        %v398 = vpop.permute.xlu0 %397
        %407 = vrot.lane.b32.xlu0 %v319, 32
        %v408 = vpop.permute.xlu0 %407
        %409 = vrot.lane.b32.xlu0 %v320, 32
        %v410 = vpop.permute.xlu0 %409
        %411 = vrot.lane.b32.xlu0 %v321, 32
        %v412 = vpop.permute.xlu0 %411
        %413 = vrot.lane.b32.xlu0 %v322, 32
        %v414 = vpop.permute.xlu0 %413
        %415 = vrot.lane.b32.xlu0 %v323, 32
        %v416 = vpop.permute.xlu0 %415
        %417 = vrot.lane.b32.xlu0 %v324, 32
        %v418 = vpop.permute.xlu0 %417
        %419 = vrot.lane.b32.xlu0 %v325, 32
        %v420 = vpop.permute.xlu0 %419
        %421 = vrot.lane.b32.xlu0 %v326, 32
        %v422 = vpop.permute.xlu0 %421
        %431 = vrot.lane.b32.xlu0 %v319, 40
        %v432 = vpop.permute.xlu0 %431
        %433 = vrot.lane.b32.xlu0 %v320, 40
        %v434 = vpop.permute.xlu0 %433
        %435 = vrot.lane.b32.xlu0 %v321, 40
        %v436 = vpop.permute.xlu0 %435
        %437 = vrot.lane.b32.xlu0 %v322, 40
        %v438 = vpop.permute.xlu0 %437
        %439 = vrot.lane.b32.xlu0 %v323, 40
        %v440 = vpop.permute.xlu0 %439
        %441 = vrot.lane.b32.xlu0 %v324, 40
        %v442 = vpop.permute.xlu0 %441
        %443 = vrot.lane.b32.xlu0 %v325, 40
        %v444 = vpop.permute.xlu0 %443
        %445 = vrot.lane.b32.xlu0 %v326, 40
        %v446 = vpop.permute.xlu0 %445
        %455 = vrot.lane.b32.xlu0 %v319, 48
        %v456 = vpop.permute.xlu0 %455
        %457 = vrot.lane.b32.xlu0 %v320, 48
        %v458 = vpop.permute.xlu0 %457
        %459 = vrot.lane.b32.xlu0 %v321, 48
        %v460 = vpop.permute.xlu0 %459
        %461 = vrot.lane.b32.xlu0 %v322, 48
        %v462 = vpop.permute.xlu0 %461
        %463 = vrot.lane.b32.xlu0 %v323, 48
        %v464 = vpop.permute.xlu0 %463
        %465 = vrot.lane.b32.xlu0 %v324, 48
        %v466 = vpop.permute.xlu0 %465
        %467 = vrot.lane.b32.xlu0 %v325, 48
        %v468 = vpop.permute.xlu0 %467
        %469 = vrot.lane.b32.xlu0 %v326, 48
        %v470 = vpop.permute.xlu0 %469
        %479 = vrot.lane.b32.xlu0 %v319, 56
        %v480 = vpop.permute.xlu0 %479
        %481 = vrot.lane.b32.xlu0 %v320, 56
        %v482 = vpop.permute.xlu0 %481
        %483 = vrot.lane.b32.xlu0 %v321, 56
        %v484 = vpop.permute.xlu0 %483
        %485 = vrot.lane.b32.xlu0 %v322, 56
        %v486 = vpop.permute.xlu0 %485
        %487 = vrot.lane.b32.xlu0 %v323, 56
        %v488 = vpop.permute.xlu0 %487
        %489 = vrot.lane.b32.xlu0 %v324, 56
        %v490 = vpop.permute.xlu0 %489
        %491 = vrot.lane.b32.xlu0 %v325, 56
        %v492 = vpop.permute.xlu0 %491
        %493 = vrot.lane.b32.xlu0 %v326, 56
        %v494 = vpop.permute.xlu0 %493
        %vm503 = vcmask 64512
        %v504 = vsel %vm503, %v319, %v336
        %v505 = vsel %vm503, %v320, %v338
        %v506 = vsel %vm503, %v321, %v340
        %v507 = vsel %vm503, %v322, %v342
        %v508 = vsel %vm503, %v323, %v344
        %v509 = vsel %vm503, %v324, %v346
        %v510 = vsel %vm503, %v325, %v348
        %v511 = vsel %vm503, %v326, %v350
        %vm512 = vcmask 130048
        %v513 = vsel %vm512, %v504, %v360
        %v514 = vsel %vm512, %v505, %v362
        %v515 = vsel %vm512, %v506, %v364
        %v516 = vsel %vm512, %v507, %v366
        %v517 = vsel %vm512, %v508, %v368
        %v518 = vsel %vm512, %v509, %v370
        %v519 = vsel %vm512, %v510, %v372
        %v520 = vsel %vm512, %v511, %v374
        %vm521 = vcmask 195584
        %v522 = vsel %vm521, %v513, %v384
        %v523 = vsel %vm521, %v514, %v386
        %v524 = vsel %vm521, %v515, %v388
        %v525 = vsel %vm521, %v516, %v390
        %v526 = vsel %vm521, %v517, %v392
        %v527 = vsel %vm521, %v518, %v394
        %v528 = vsel %vm521, %v519, %v396
        %v529 = vsel %vm521, %v520, %v398
        %vm530 = vcmask 261120
        %v531 = vsel %vm530, %v522, %v408
        %v532 = vsel %vm530, %v523, %v410
        %v533 = vsel %vm530, %v524, %v412
        %v534 = vsel %vm530, %v525, %v414
        %v535 = vsel %vm530, %v526, %v416
        %v536 = vsel %vm530, %v527, %v418
        %v537 = vsel %vm530, %v528, %v420
        %v538 = vsel %vm530, %v529, %v422
        %vm539 = vcmask 326656
        %v540 = vsel %vm539, %v531, %v432
        %v541 = vsel %vm539, %v532, %v434
        %v542 = vsel %vm539, %v533, %v436
        %v543 = vsel %vm539, %v534, %v438
        %v544 = vsel %vm539, %v535, %v440
        %v545 = vsel %vm539, %v536, %v442
        %v546 = vsel %vm539, %v537, %v444
        %v547 = vsel %vm539, %v538, %v446
        %vm548 = vcmask 392192
        %v549 = vsel %vm548, %v540, %v456
        %v550 = vsel %vm548, %v541, %v458
        %v551 = vsel %vm548, %v542, %v460
        %v552 = vsel %vm548, %v543, %v462
        %v553 = vsel %vm548, %v544, %v464
        %v554 = vsel %vm548, %v545, %v466
        %v555 = vsel %vm548, %v546, %v468
        %v556 = vsel %vm548, %v547, %v470
        %vm557 = vcmask 457728
        %v558 = vsel %vm557, %v549, %v480
        %v559 = vsel %vm557, %v550, %v482
        %v560 = vsel %vm557, %v551, %v484
        %v561 = vsel %vm557, %v552, %v486
        %v562 = vsel %vm557, %v553, %v488
        %v563 = vsel %vm557, %v554, %v490
        %v564 = vsel %vm557, %v555, %v492
        %v565 = vsel %vm557, %v556, %v494
        %v566 = vlaneseq
        %v567 = vshrl.u32 %v566, 7
        %v568 = vadd.s32 %v567, 8
        %v569 = vadd.s32 %v567, 16
        %v570 = vadd.s32 %v567, 24
        %v571 = vadd.s32 %v567, 32
        %v572 = vadd.s32 %v567, 40
        %v573 = vadd.s32 %v567, 48
        %v574 = vadd.s32 %v567, 56
        %v575 = vlaneseq
        %v576 = vand.u32 %v575, 127
        %v577 = vshra.s32 %v567, 3
        %v578 = vshra.s32 %v568, 3
        %v579 = vshra.s32 %v569, 3
        %v580 = vshra.s32 %v570, 3
        %v581 = vshra.s32 %v571, 3
        %v582 = vshra.s32 %v572, 3
        %v583 = vshra.s32 %v573, 3
        %v584 = vshra.s32 %v574, 3
        %v585 = vshra.s32 %v576, 3
        %vm586 = vcmp.eq.s32.totalorder %v577, %v585
        %vm587 = vcmp.eq.s32.totalorder %v578, %v585
        %vm588 = vcmp.eq.s32.totalorder %v579, %v585
        %vm589 = vcmp.eq.s32.totalorder %v580, %v585
        %vm590 = vcmp.eq.s32.totalorder %v581, %v585
        %vm591 = vcmp.eq.s32.totalorder %v582, %v585
        %vm592 = vcmp.eq.s32.totalorder %v583, %v585
        %vm593 = vcmp.eq.s32.totalorder %v584, %v585
        %v594 = vsel %vm586, %v558, 0.0
        %v595 = vsel %vm587, %v559, 0.0
        %v596 = vsel %vm588, %v560, 0.0
        %v597 = vsel %vm589, %v561, 0.0
        %v598 = vsel %vm590, %v562, 0.0
        %v599 = vsel %vm591, %v563, 0.0
        %v600 = vsel %vm592, %v564, 0.0
        %v601 = vsel %vm593, %v565, 0.0
        %v602 = vld [vmem:[%s269] sm:$0xff]
        %v603 = vld [vmem:[%s269 + $0x8] sm:$0xff]
        %v604 = vld [vmem:[%s269 + $0x10] sm:$0xff]
        %v605 = vld [vmem:[%s269 + $0x18] sm:$0xff]
        %v606 = vld [vmem:[%s269 + $0x20] sm:$0xff]
        %v607 = vld [vmem:[%s269 + $0x28] sm:$0xff]
        %v608 = vld [vmem:[%s269 + $0x30] sm:$0xff]
        %v609 = vld [vmem:[%s269 + $0x38] sm:$0xff]
        %vm610 = vcmask 523264
        %v612 = vsel %vm610, %v594, 0
        %v615 = vsel %vm610, %v595, 0
        %v618 = vsel %vm610, %v596, 0
        %v621 = vsel %vm610, %v597, 0
        %v624 = vsel %vm610, %v598, 0
        %v627 = vsel %vm610, %v599, 0
        %v630 = vsel %vm610, %v600, 0
        %v633 = vsel %vm610, %v601, 0
        %635 = vmatpush.msra.mxu0 0.0
        %636 = vmatpush.msra.mxu0 0.0
        %637 = vmatpush.msra.mxu0 0.0
        %638 = vmatpush.msra.mxu0 0.0
        %639 = vmatpush.msra.mxu0 0.0
        %640 = vmatpush.msra.mxu0 0.0
        %641 = vmatpush.msra.mxu0 0.0
        %642 = vmatpush.msra.mxu0 0.0
        %643 = vmatpush.msra.mxu0 %v609
        %644 = vmatpush.msra.mxu0 %v608
        %645 = vmatpush.msra.mxu0 %v607
        %646 = vmatpush.msra.mxu0 %v606
        %647 = vmatpush.msra.mxu0 %v605
        %648 = vmatpush.msra.mxu0 %v604
        %649 = vmatpush.msra.mxu0 %v603
        %650 = vmatpush.msra.mxu0 %v602
        %651 = vmatmul.f32.gmra.mxu0 %v612
        %v652 = vpop.f32.mrf.mxu0
        %v653 = vadd.f32 0.0, %v652
        %654 = vmatmul.f32.gmra.mxu0 %v615
        %v655 = vpop.f32.mrf.mxu0
        %v656 = vadd.f32 0.0, %v655
        %657 = vmatmul.f32.gmra.mxu0 %v618
        %v658 = vpop.f32.mrf.mxu0
        %v659 = vadd.f32 0.0, %v658
        %660 = vmatmul.f32.gmra.mxu0 %v621
        %v661 = vpop.f32.mrf.mxu0
        %v662 = vadd.f32 0.0, %v661
        %663 = vmatmul.f32.gmra.mxu0 %v624
        %v664 = vpop.f32.mrf.mxu0
        %v665 = vadd.f32 0.0, %v664
        %666 = vmatmul.f32.gmra.mxu0 %v627
        %v667 = vpop.f32.mrf.mxu0
        %v668 = vadd.f32 0.0, %v667
        %669 = vmatmul.f32.gmra.mxu0 %v630
        %v670 = vpop.f32.mrf.mxu0
        %v671 = vadd.f32 0.0, %v670
        %672 = vmatmul.f32.gmra.mxu0 %v633
        %v673 = vpop.f32.mrf.mxu0
        %v674 = vadd.f32 0.0, %v673
        %675 = vdwg.mxu0
        %v676 = vld [vmem:[%s4] sm:$0xff]
        %v677 = vld [vmem:[%s4 + $0x8] sm:$0xff]
        %v678 = vld [vmem:[%s4 + $0xa8] sm:$0x1]
        %v679 = vperm.slane %v678, 0
        %v681 = vsel %vm512, %v653, 0
        %v684 = vsel %vm512, %v656, 0
        %v687 = vsel %vm512, %v659, 0
        %v690 = vsel %vm512, %v662, 0
        %v693 = vsel %vm512, %v665, 0
        %v696 = vsel %vm512, %v668, 0
        %v699 = vsel %vm512, %v671, 0
        %v702 = vsel %vm512, %v674, 0
        %704 = vmatpush.msra.mxu0 0.0
        %705 = vmatpush.msra.mxu0 0.0
        %706 = vmatpush.msra.mxu0 0.0
        %707 = vmatpush.msra.mxu0 0.0
        %708 = vmatpush.msra.mxu0 0.0
        %709 = vmatpush.msra.mxu0 0.0
        %710 = vmatpush.msra.mxu0 0.0
        %711 = vmatpush.msra.mxu0 0.0
        %712 = vmatpush.msra.mxu0 0.0
        %713 = vmatpush.msra.mxu0 0.0
        %714 = vmatpush.msra.mxu0 0.0
        %715 = vmatpush.msra.mxu0 0.0
        %716 = vmatpush.msra.mxu0 0.0
        %717 = vmatpush.msra.mxu0 0.0
        %718 = vmatpush.msra.mxu0 %v677
        %719 = vmatpush.msra.mxu0 %v676
        %720 = vmatmul.f32.gmra.mxu0 %v681
        %v721 = vpop.f32.mrf.mxu0
        %v722 = vadd.f32 %v679, %v721
        %723 = vmatmul.f32.gmra.mxu0 %v684
        %v724 = vpop.f32.mrf.mxu0
        %v725 = vadd.f32 %v679, %v724
        %726 = vmatmul.f32.gmra.mxu0 %v687
        %v727 = vpop.f32.mrf.mxu0
        %v728 = vadd.f32 %v679, %v727
        %729 = vmatmul.f32.gmra.mxu0 %v690
        %v730 = vpop.f32.mrf.mxu0
        %v731 = vadd.f32 %v679, %v730
        %732 = vmatmul.f32.gmra.mxu0 %v693
        %v733 = vpop.f32.mrf.mxu0
        %v734 = vadd.f32 %v679, %v733
        %735 = vmatmul.f32.gmra.mxu0 %v696
        %v736 = vpop.f32.mrf.mxu0
        %v737 = vadd.f32 %v679, %v736
        %738 = vmatmul.f32.gmra.mxu0 %v699
        %v739 = vpop.f32.mrf.mxu0
        %v740 = vadd.f32 %v679, %v739
        %741 = vmatmul.f32.gmra.mxu0 %v702
        %v742 = vpop.f32.mrf.mxu0
        %v743 = vadd.f32 %v679, %v742
        %744 = vdwg.mxu0
        %v745 = vmax.f32 %v722, 0.0
        %v746 = vmax.f32 %v725, 0.0
        %v747 = vmax.f32 %v728, 0.0
        %v748 = vmax.f32 %v731, 0.0
        %v749 = vmax.f32 %v734, 0.0
        %v750 = vmax.f32 %v737, 0.0
        %v751 = vmax.f32 %v740, 0.0
        %v752 = vmax.f32 %v743, 0.0
        %753 = vmatpush.msra.mxu0 0.0
        %754 = vmatpush.msra.mxu0 0.0
        %755 = vmatpush.msra.mxu0 0.0
        %756 = vmatpush.msra.mxu0 0.0
        %757 = vmatpush.msra.mxu0 0.0
        %758 = vmatpush.msra.mxu0 0.0
        %759 = vmatpush.msra.mxu0 0.0
        %760 = vmatpush.msra.mxu0 0.0
        %761 = vmatpush.msra.mxu0 %v752
        %762 = vmatpush.msra.mxu0 %v751
        %763 = vmatpush.msra.mxu0 %v750
        %764 = vmatpush.msra.mxu0 %v749
        %765 = vmatpush.msra.mxu0 %v748
        %766 = vmatpush.msra.mxu0 %v747
        %767 = vmatpush.msra.mxu0 %v746
        %768 = vmatpush.msra.mxu0 %v745
        %769 = vmatmul.f32.gmra.mxu0 %v612
        %v770 = vpop.f32.mrf.mxu0
        %v771 = vadd.f32 0.0, %v770
        %772 = vmatmul.f32.gmra.mxu0 %v615
        %v773 = vpop.f32.mrf.mxu0
        %v774 = vadd.f32 0.0, %v773
        %775 = vmatmul.f32.gmra.mxu0 %v618
        %v776 = vpop.f32.mrf.mxu0
        %v777 = vadd.f32 0.0, %v776
        %778 = vmatmul.f32.gmra.mxu0 %v621
        %v779 = vpop.f32.mrf.mxu0
        %v780 = vadd.f32 0.0, %v779
        %781 = vmatmul.f32.gmra.mxu0 %v624
        %v782 = vpop.f32.mrf.mxu0
        %v783 = vadd.f32 0.0, %v782
        %784 = vmatmul.f32.gmra.mxu0 %v627
        %v785 = vpop.f32.mrf.mxu0
        %v786 = vadd.f32 0.0, %v785
        %787 = vmatmul.f32.gmra.mxu0 %v630
        %v788 = vpop.f32.mrf.mxu0
        %v789 = vadd.f32 0.0, %v788
        %790 = vmatmul.f32.gmra.mxu0 %v633
        %v791 = vpop.f32.mrf.mxu0
        %v792 = vadd.f32 0.0, %v791
        %793 = vdwg.mxu0
        %v794 = vld [vmem:[%s4 + $0x10] sm:$0xff]
        %v795 = vld [vmem:[%s4 + $0x18] sm:$0xff]
        %v796 = vld [vmem:[%s4 + $0x20] sm:$0xff]
        %v797 = vld [vmem:[%s4 + $0x28] sm:$0xff]
        %v798 = vld [vmem:[%s4 + $0xa9] sm:$0x1]
        %v799 = vperm.slane %v798, 0
        %v801 = vsel %vm530, %v771, 0
        %v804 = vsel %vm530, %v774, 0
        %v807 = vsel %vm530, %v777, 0
        %v810 = vsel %vm530, %v780, 0
        %v813 = vsel %vm530, %v783, 0
        %v816 = vsel %vm530, %v786, 0
        %v819 = vsel %vm530, %v789, 0
        %v822 = vsel %vm530, %v792, 0
        %824 = vmatpush.msra.mxu0 0.0
        %825 = vmatpush.msra.mxu0 0.0
        %826 = vmatpush.msra.mxu0 0.0
        %827 = vmatpush.msra.mxu0 0.0
        %828 = vmatpush.msra.mxu0 0.0
        %829 = vmatpush.msra.mxu0 0.0
        %830 = vmatpush.msra.mxu0 0.0
        %831 = vmatpush.msra.mxu0 0.0
        %832 = vmatpush.msra.mxu0 0.0
        %833 = vmatpush.msra.mxu0 0.0
        %834 = vmatpush.msra.mxu0 0.0
        %835 = vmatpush.msra.mxu0 0.0
        %836 = vmatpush.msra.mxu0 %v797
        %837 = vmatpush.msra.mxu0 %v796
        %838 = vmatpush.msra.mxu0 %v795
        %839 = vmatpush.msra.mxu0 %v794
        %840 = vmatmul.f32.gmra.mxu0 %v801
        %v841 = vpop.f32.mrf.mxu0
        %v842 = vadd.f32 %v799, %v841
        %843 = vmatmul.f32.gmra.mxu0 %v804
        %v844 = vpop.f32.mrf.mxu0
        %v845 = vadd.f32 %v799, %v844
        %846 = vmatmul.f32.gmra.mxu0 %v807
        %v847 = vpop.f32.mrf.mxu0
        %v848 = vadd.f32 %v799, %v847
        %849 = vmatmul.f32.gmra.mxu0 %v810
        %v850 = vpop.f32.mrf.mxu0
        %v851 = vadd.f32 %v799, %v850
        %852 = vmatmul.f32.gmra.mxu0 %v813
        %v853 = vpop.f32.mrf.mxu0
        %v854 = vadd.f32 %v799, %v853
        %855 = vmatmul.f32.gmra.mxu0 %v816
        %v856 = vpop.f32.mrf.mxu0
        %v857 = vadd.f32 %v799, %v856
        %858 = vmatmul.f32.gmra.mxu0 %v819
        %v859 = vpop.f32.mrf.mxu0
        %v860 = vadd.f32 %v799, %v859
        %861 = vmatmul.f32.gmra.mxu0 %v822
        %v862 = vpop.f32.mrf.mxu0
        %v863 = vadd.f32 %v799, %v862
        %864 = vdwg.mxu0
        %v865 = vmax.f32 %v842, 0.0
        %v866 = vmax.f32 %v845, 0.0
        %v867 = vmax.f32 %v848, 0.0
        %v868 = vmax.f32 %v851, 0.0
        %v869 = vmax.f32 %v854, 0.0
        %v870 = vmax.f32 %v857, 0.0
        %v871 = vmax.f32 %v860, 0.0
        %v872 = vmax.f32 %v863, 0.0
        %vm873 = vcmp.eq.s32.totalorder %v567, %v585
        %v874 = vsel %vm873, 0.125, 0.0
        %v876 = vsel %vm610, %v874, 0
        %878 = vmatpush.msra.mxu0 0.0
        %879 = vmatpush.msra.mxu0 0.0
        %880 = vmatpush.msra.mxu0 0.0
        %881 = vmatpush.msra.mxu0 0.0
        %882 = vmatpush.msra.mxu0 0.0
        %883 = vmatpush.msra.mxu0 0.0
        %884 = vmatpush.msra.mxu0 0.0
        %885 = vmatpush.msra.mxu0 0.0
        %886 = vmatpush.msra.mxu0 %v872
        %887 = vmatpush.msra.mxu0 %v871
        %888 = vmatpush.msra.mxu0 %v870
        %889 = vmatpush.msra.mxu0 %v869
        %890 = vmatpush.msra.mxu0 %v868
        %891 = vmatpush.msra.mxu0 %v867
        %892 = vmatpush.msra.mxu0 %v866
        %893 = vmatpush.msra.mxu0 %v865
        %894 = vmatmul.f32.gmra.mxu0 %v876
        %v895 = vpop.f32.mrf.mxu0
        %v896 = vadd.f32 0.0, %v895
        %897 = vdwg.mxu0
        %v898 = vld [vmem:[%s311] sm:$0xff]
        %v899 = vld [vmem:[%s315] sm:$0xff]
        %v900 = vld [vmem:[%s4 + $0x30] sm:$0xff]
        %v901 = vld [vmem:[%s4 + $0x38] sm:$0xff]
        %v902 = vld [vmem:[%s4 + $0x40] sm:$0xff]
        %v904 = vsel %vm512, %v896, 0
        %906 = vmatpush.msra.mxu0 0.0
        %907 = vmatpush.msra.mxu0 0.0
        %908 = vmatpush.msra.mxu0 0.0
        %909 = vmatpush.msra.mxu0 0.0
        %910 = vmatpush.msra.mxu0 0.0
        %911 = vmatpush.msra.mxu0 0.0
        %912 = vmatpush.msra.mxu0 0.0
        %913 = vmatpush.msra.mxu0 0.0
        %914 = vmatpush.msra.mxu0 0.0
        %915 = vmatpush.msra.mxu0 0.0
        %916 = vmatpush.msra.mxu0 0.0
        %917 = vmatpush.msra.mxu0 0.0
        %918 = vmatpush.msra.mxu0 0.0
        %919 = vmatpush.msra.mxu0 0.0
        %920 = vmatpush.msra.mxu0 %v902
        %921 = vmatpush.msra.mxu0 %v901
        %922 = vmatmul.f32.gmra.mxu0 %v904
        %v923 = vpop.f32.mrf.mxu0
        %v924 = vadd.f32 0.0, %v923
        %925 = vdwg.mxu0
        %v927 = vsel %vm503, %v899, 0
        %929 = vmatpush.msra.mxu0 0.0
        %930 = vmatpush.msra.mxu0 0.0
        %931 = vmatpush.msra.mxu0 0.0
        %932 = vmatpush.msra.mxu0 0.0
        %933 = vmatpush.msra.mxu0 0.0
        %934 = vmatpush.msra.mxu0 0.0
        %935 = vmatpush.msra.mxu0 0.0
        %936 = vmatpush.msra.mxu0 0.0
        %937 = vmatpush.msra.mxu0 0.0
        %938 = vmatpush.msra.mxu0 0.0
        %939 = vmatpush.msra.mxu0 0.0
        %940 = vmatpush.msra.mxu0 0.0
        %941 = vmatpush.msra.mxu0 0.0
        %942 = vmatpush.msra.mxu0 0.0
        %943 = vmatpush.msra.mxu0 0.0
        %944 = vmatpush.msra.mxu0 %v900
        %945 = vmatmul.f32.gmra.mxu0 %v927
        %v946 = vpop.f32.mrf.mxu0
        %v947 = vadd.f32 %v924, %v946
        %948 = vdwg.mxu0
        %v949 = vld [vmem:[%s4 + $0xaa] sm:$0x1]
        %v950 = vperm.slane %v949, 0
        %v952 = vsel %vm503, %v898, 0
        %954 = vmatpush.msra.mxu0 0.0
        %955 = vmatpush.msra.mxu0 0.0
        %956 = vmatpush.msra.mxu0 0.0
        %957 = vmatpush.msra.mxu0 0.0
        %958 = vmatpush.msra.mxu0 0.0
        %959 = vmatpush.msra.mxu0 0.0
        %960 = vmatpush.msra.mxu0 0.0
        %961 = vmatpush.msra.mxu0 0.0
        %962 = vmatpush.msra.mxu0 0.0
        %963 = vmatpush.msra.mxu0 0.0
        %964 = vmatpush.msra.mxu0 0.0
        %965 = vmatpush.msra.mxu0 0.0
        %966 = vmatpush.msra.mxu0 0.0
        %967 = vmatpush.msra.mxu0 0.0
        %968 = vmatpush.msra.mxu0 0.0
        %969 = vmatpush.msra.mxu0 %v947
        %970 = vmatmul.f32.gmra.mxu0 %v952
        %v971 = vpop.f32.mrf.mxu0
        %v972 = vadd.f32 %v950, %v971
        %973 = vdwg.mxu0
        %v974 = vmax.f32 %v972, 0.0
        %975 = vmatpush.msra.mxu0 0.0
        %976 = vmatpush.msra.mxu0 0.0
        %977 = vmatpush.msra.mxu0 0.0
        %978 = vmatpush.msra.mxu0 0.0
        %979 = vmatpush.msra.mxu0 0.0
        %980 = vmatpush.msra.mxu0 0.0
        %981 = vmatpush.msra.mxu0 0.0
        %982 = vmatpush.msra.mxu0 0.0
        %983 = vmatpush.msra.mxu0 0.0
        %984 = vmatpush.msra.mxu0 0.0
        %985 = vmatpush.msra.mxu0 0.0
        %986 = vmatpush.msra.mxu0 0.0
        %987 = vmatpush.msra.mxu0 0.0
        %988 = vmatpush.msra.mxu0 0.0
        %989 = vmatpush.msra.mxu0 0.0
        %990 = vmatpush.msra.mxu0 %v974
        %991 = vmatmul.f32.gmra.mxu0 %v952
        %v992 = vpop.f32.mrf.mxu0
        %v993 = vadd.f32 0.0, %v992
        %994 = vdwg.mxu0
        %v995 = vld [vmem:[%s4 + $0x48] sm:$0xff]
        %v996 = vld [vmem:[%s4 + $0x50] sm:$0xff]
        %v997 = vld [vmem:[%s4 + $0x58] sm:$0xff]
        %v998 = vld [vmem:[%s4 + $0x60] sm:$0xff]
        %v999 = vld [vmem:[%s4 + $0xab] sm:$0x1]
        %v1000 = vperm.slane %v999, 0
        %v1002 = vsel %vm530, %v993, 0
        %1004 = vmatpush.msra.mxu0 0.0
        %1005 = vmatpush.msra.mxu0 0.0
        %1006 = vmatpush.msra.mxu0 0.0
        %1007 = vmatpush.msra.mxu0 0.0
        %1008 = vmatpush.msra.mxu0 0.0
        %1009 = vmatpush.msra.mxu0 0.0
        %1010 = vmatpush.msra.mxu0 0.0
        %1011 = vmatpush.msra.mxu0 0.0
        %1012 = vmatpush.msra.mxu0 0.0
        %1013 = vmatpush.msra.mxu0 0.0
        %1014 = vmatpush.msra.mxu0 0.0
        %1015 = vmatpush.msra.mxu0 0.0
        %1016 = vmatpush.msra.mxu0 %v998
        %1017 = vmatpush.msra.mxu0 %v997
        %1018 = vmatpush.msra.mxu0 %v996
        %1019 = vmatpush.msra.mxu0 %v995
        %1020 = vmatmul.f32.gmra.mxu0 %v1002
        %v1021 = vpop.f32.mrf.mxu0
        %v1022 = vadd.f32 %v1000, %v1021
        %1023 = vdwg.mxu0
        %v1024 = vmax.f32 %v1022, 0.0
        %1025 = vmatpush.msra.mxu0 0.0
        %1026 = vmatpush.msra.mxu0 0.0
        %1027 = vmatpush.msra.mxu0 0.0
        %1028 = vmatpush.msra.mxu0 0.0
        %1029 = vmatpush.msra.mxu0 0.0
        %1030 = vmatpush.msra.mxu0 0.0
        %1031 = vmatpush.msra.mxu0 0.0
        %1032 = vmatpush.msra.mxu0 0.0
        %1033 = vmatpush.msra.mxu0 0.0
        %1034 = vmatpush.msra.mxu0 0.0
        %1035 = vmatpush.msra.mxu0 0.0
        %1036 = vmatpush.msra.mxu0 0.0
        %1037 = vmatpush.msra.mxu0 0.0
        %1038 = vmatpush.msra.mxu0 0.0
        %1039 = vmatpush.msra.mxu0 0.0
        %1040 = vmatpush.msra.mxu0 %v1024
        %1041 = vmatmul.f32.gmra.mxu0 %v952
        %v1042 = vpop.f32.mrf.mxu0
        %v1043 = vadd.f32 0.0, %v1042
        %1044 = vdwg.mxu0
        %v1045 = vld [vmem:[%s4 + $0x68] sm:$0xff]
        %v1046 = vld [vmem:[%s4 + $0x70] sm:$0xff]
        %v1047 = vld [vmem:[%s4 + $0xac] sm:$0x1]
        %v1048 = vperm.slane %v1047, 0
        %v1050 = vsel %vm512, %v1043, 0
        %1052 = vmatpush.msra.mxu0 0.0
        %1053 = vmatpush.msra.mxu0 0.0
        %1054 = vmatpush.msra.mxu0 0.0
        %1055 = vmatpush.msra.mxu0 0.0
        %1056 = vmatpush.msra.mxu0 0.0
        %1057 = vmatpush.msra.mxu0 0.0
        %1058 = vmatpush.msra.mxu0 0.0
        %1059 = vmatpush.msra.mxu0 0.0
        %1060 = vmatpush.msra.mxu0 0.0
        %1061 = vmatpush.msra.mxu0 0.0
        %1062 = vmatpush.msra.mxu0 0.0
        %1063 = vmatpush.msra.mxu0 0.0
        %1064 = vmatpush.msra.mxu0 0.0
        %1065 = vmatpush.msra.mxu0 0.0
        %1066 = vmatpush.msra.mxu0 %v1046
        %1067 = vmatpush.msra.mxu0 %v1045
        %1068 = vmatmul.f32.gmra.mxu0 %v1050
        %v1069 = vpop.f32.mrf.mxu0
        %v1070 = vadd.f32 %v1048, %v1069
        %1071 = vdwg.mxu0
        %v1072 = vmax.f32 %v1070, 0.0
        %1073 = vmatpush.msra.mxu0 0.0
        %1074 = vmatpush.msra.mxu0 0.0
        %1075 = vmatpush.msra.mxu0 0.0
        %1076 = vmatpush.msra.mxu0 0.0
        %1077 = vmatpush.msra.mxu0 0.0
        %1078 = vmatpush.msra.mxu0 0.0
        %1079 = vmatpush.msra.mxu0 0.0
        %1080 = vmatpush.msra.mxu0 0.0
        %1081 = vmatpush.msra.mxu0 0.0
        %1082 = vmatpush.msra.mxu0 0.0
        %1083 = vmatpush.msra.mxu0 0.0
        %1084 = vmatpush.msra.mxu0 0.0
        %1085 = vmatpush.msra.mxu0 0.0
        %1086 = vmatpush.msra.mxu0 0.0
        %1087 = vmatpush.msra.mxu0 0.0
        %1088 = vmatpush.msra.mxu0 %v1072
        %1089 = vmatmul.f32.gmra.mxu0 %v952
        %v1090 = vpop.f32.mrf.mxu0
        %v1091 = vadd.f32 0.0, %v1090
        %1092 = vdwg.mxu0
        %v1093 = vld [vmem:[%s4 + $0x78] sm:$0xff]
        %v1094 = vld [vmem:[%s4 + $0x80] sm:$0xff]
        %v1095 = vld [vmem:[%s4 + $0x88] sm:$0xff]
        %v1096 = vld [vmem:[%s4 + $0x90] sm:$0xff]
        %v1097 = vld [vmem:[%s4 + $0xad] sm:$0x1]
        %v1098 = vperm.slane %v1097, 0
        %v1100 = vsel %vm530, %v1091, 0
        %1102 = vmatpush.msra.mxu0 0.0
        %1103 = vmatpush.msra.mxu0 0.0
        %1104 = vmatpush.msra.mxu0 0.0
        %1105 = vmatpush.msra.mxu0 0.0
        %1106 = vmatpush.msra.mxu0 0.0
        %1107 = vmatpush.msra.mxu0 0.0
        %1108 = vmatpush.msra.mxu0 0.0
        %1109 = vmatpush.msra.mxu0 0.0
        %1110 = vmatpush.msra.mxu0 0.0
        %1111 = vmatpush.msra.mxu0 0.0
        %1112 = vmatpush.msra.mxu0 0.0
        %1113 = vmatpush.msra.mxu0 0.0
        %1114 = vmatpush.msra.mxu0 %v1096
        %1115 = vmatpush.msra.mxu0 %v1095
        %1116 = vmatpush.msra.mxu0 %v1094
        %1117 = vmatpush.msra.mxu0 %v1093
        %1118 = vmatmul.f32.gmra.mxu0 %v1100
        %v1119 = vpop.f32.mrf.mxu0
        %v1120 = vadd.f32 %v1098, %v1119
        %1121 = vdwg.mxu0
        %v1122 = vmax.f32 %v1120, 0.0
        %v1123 = vsel %vm512, %v1122, 0.0
        %v1124 = vrot.slane %v1123, 4
        %v1125 = vadd.f32 %v1123, %v1124
        %v1126 = vrot.slane %v1125, 2
        %v1127 = vadd.f32 %v1125, %v1126
        %v1128 = vrot.slane %v1127, 1
        %v1129 = vadd.f32 %v1127, %v1128
        %v1130 = vmul.f32 %v1129, 0.125
        %v1131 = vld [vmem:[%s4 + $0x98] sm:$0xff]
        %v1132 = vld [vmem:[%s4 + $0xa0] sm:$0xff]
        %v1133 = vld [vmem:[%s4 + $0xae] sm:$0x1]
        %v1135 = vsel %vm512, %v1130, 0
        %1137 = vmatpush.msra.mxu0 0.0
        %1138 = vmatpush.msra.mxu0 0.0
        %1139 = vmatpush.msra.mxu0 0.0
        %1140 = vmatpush.msra.mxu0 0.0
        %1141 = vmatpush.msra.mxu0 0.0
        %1142 = vmatpush.msra.mxu0 0.0
        %1143 = vmatpush.msra.mxu0 0.0
        %1144 = vmatpush.msra.mxu0 0.0
        %1145 = vmatpush.msra.mxu0 0.0
        %1146 = vmatpush.msra.mxu0 0.0
        %1147 = vmatpush.msra.mxu0 0.0
        %1148 = vmatpush.msra.mxu0 0.0
        %1149 = vmatpush.msra.mxu0 0.0
        %1150 = vmatpush.msra.mxu0 0.0
        %1151 = vmatpush.msra.mxu0 %v1132
        %1152 = vmatpush.msra.mxu0 %v1131
        %1153 = vmatmul.f32.gmra.mxu0 %v1135
        %v1154 = vpop.f32.mrf.mxu0
        %v1155 = vadd.f32 %v1133, %v1154
        %1156 = vdwg.mxu0
        %vm1157 = vcmask 24576
        %1158 = vst.msk [vmem:[%s318] sm:$0x1] %vm1157, %v1155
        %p1159 = scmp.lt.s32.totalorder %s22, 7
        %s1160 = scalar_select %p1159, %s22, 7
        %s1161 = scalar_lea.vmem %s5, %s1160
        // Predicated region
        $region49: #{nested_gnn_forward.1} parent=39 // pred_check
          %p1162 = pneg %p165
        $region50: #{nested_gnn_forward.1} parent=39 // pred_check_branch
          %1164 = sbr.rel (%p1162) target = $region52
        $region51: #{nested_gnn_forward.1} parent=39 // pred_region
          _
        $region52: #{nested_gnn_forward.1} parent=39 // pred_fallthru
          _
      $region40: #{nested_gnn_forward.1} parent=5 // pred_fallthru
        _
      %p1165 = scmp.le.s32.totalorder 2, %s17
      // Predicated region
      $region53: #{nested_gnn_forward.1} parent=5 // pred_check
        %p1166 = pneg %p1165
      $region54: #{nested_gnn_forward.1} parent=5 // pred_check_branch
        %1168 = sbr.rel (%p1166) target = $region56
      $region55: #{nested_gnn_forward.1} parent=5 // pred_region
        %s1169 = ssub.s32 %s17, 2
        // Predicated region
        $region57: #{nested_gnn_forward.1} parent=55 // pred_check
          %p1170 = pneg %p171
        $region58: #{nested_gnn_forward.1} parent=55 // pred_check_branch
          %1172 = sbr.rel (%p1170) target = $region60
        $region59: #{nested_gnn_forward.1} parent=55 // pred_region
          %p1173 = scmp.lt.s32.totalorder %s23, 7
          %s1174 = scalar_select %p1173, %s23, 7
          %s1175 = scalar_lea.vmem %s5, %s1174
        $region60: #{nested_gnn_forward.1} parent=55 // pred_fallthru
          _
      $region56: #{nested_gnn_forward.1} parent=5 // pred_fallthru
        _
    $region6: #{nested_gnn_forward.1} parent=1 // loop_footer
      %s21 = sadd.s32 1, %s17
    $region7: #{nested_gnn_forward.1} parent=1 // loop_footer_branch
      %16 = sbr.rel target = $region3
    $region8: #{nested_gnn_forward.1} parent=1 // loop_exit
      _
    %1176 = vsyncpa [#allocation3], 1
    %s1177 = scalar_lea.sflag [#allocation3], 1
    %1178 = vsyncpa %s1177, 1
    %1179 = vsyncpa [#allocation5], 1
    %s1180 = scalar_lea.sflag [#allocation5], 1
    %1181 = vsyncpa %s1180, 1

</llo_original>
